<compile_context>
chip_gen: v5e
topology: v5e:2x2
jax: 0.10.0
libtpu: 0.0.40
codegen_flags: <defaults>
</compile_context>

<pallas_src>
import jax
import jax.numpy as jnp
from jax.experimental import pallas as pl
from jax.experimental.pallas import tpu as pltpu


def _multi_task_loss_kernel(seg_pred_ref, seg_true_ref,
                            sub_pred_ref, sub_oh_ref,
                            grade_pred_ref, grade_true_ref,
                            log_vars_ref,
                            total_ref, dice_ref, ce_ref, mse_ref,
                            inter_acc, psum_acc, tsum_acc):
    n = pl.program_id(0)
    t = pl.program_id(1)
    is_first = jnp.logical_and(n == 0, t == 0)
    is_last = jnp.logical_and(n == pl.num_programs(0) - 1,
                              t == pl.num_programs(1) - 1)

    @pl.when(is_first)
    def _():
        inter_acc[...] = jnp.zeros_like(inter_acc)
        psum_acc[...] = jnp.zeros_like(psum_acc)
        tsum_acc[...] = jnp.zeros_like(tsum_acc)

    # ---- streaming dice partial sums over this (C, Rt, L) pixel tile -------
    sp = seg_pred_ref[...].astype(jnp.float32)          # (C, Rt, L)
    st = seg_true_ref[...].astype(jnp.float32)          # (C, Rt, L)
    # Channel axis is a leading (untiled) dim: channel reductions are pure
    # VPU elementwise ops across the C slabs.
    m = jnp.max(sp, axis=0, keepdims=True)              # (1, Rt, L)
    e = jnp.exp(sp - m)                                  # (C, Rt, L)  EUP
    s = jnp.sum(e, axis=0)                               # (Rt, L)
    inv = 1.0 / s                                        # exact divide per pixel
    inter_pix = jnp.sum(e * st, axis=0) * inv            # (Rt, L) sum_c soft*true
    psum_pix = s * inv                                    # (Rt, L) sum_c soft (~1)
    tsum_pix = jnp.sum(st, axis=0)                        # (Rt, L)
    # Fold sublanes only; lanes stay resident so the cross-lane reduction
    # happens exactly once (epilogue), not per tile.
    inter_acc[...] += jnp.sum(inter_pix, axis=0, keepdims=True)
    psum_acc[...] += jnp.sum(psum_pix, axis=0, keepdims=True)
    tsum_acc[...] += jnp.sum(tsum_pix, axis=0, keepdims=True)

    # ---- epilogue: finish dice, CE, MSE, uncertainty-weighted total --------
    @pl.when(is_last)
    def _():
        inter = jnp.sum(inter_acc[...], keepdims=True)    # (1, 1)
        psum = jnp.sum(psum_acc[...], keepdims=True)
        tsum = jnp.sum(tsum_acc[...], keepdims=True)
        dice = 1.0 - (2.0 * inter + 1e-8) / (psum + tsum + 1e-8)

        lp = sub_pred_ref[...].astype(jnp.float32)        # (N, K) logits
        lm = jnp.max(lp, axis=-1, keepdims=True)
        lse = jnp.log(jnp.sum(jnp.exp(lp - lm), axis=-1, keepdims=True)) + lm
        n_batch = float(lp.shape[0])
        ce = -jnp.sum(sub_oh_ref[...].astype(jnp.float32) * (lp - lse),
                      keepdims=True) / n_batch            # (1, 1)

        d = (grade_pred_ref[...].astype(jnp.float32)
             - grade_true_ref[...].astype(jnp.float32))   # (1, N)
        mse = jnp.sum(d * d, keepdims=True) / float(d.size)

        lv = log_vars_ref[...].astype(jnp.float32)        # (1, 3)
        prec = jnp.exp(-lv)
        total = (prec[:, 0:1] * dice + lv[:, 0:1]
                 + prec[:, 1:2] * ce + lv[:, 1:2]
                 + prec[:, 2:3] * mse + lv[:, 2:3])       # (1, 1)

        total_ref[...] = total
        dice_ref[...] = dice
        ce_ref[...] = ce
        mse_ref[...] = mse


def _pick_row_tile(num_rows, channels, lane, itemsize, target_bytes=2 << 20):
    """Largest row tile dividing num_rows: multiple of 8 (or full extent),
    sized so one (C, Rt, lane) input block is ~target_bytes."""
    max_rows = max(8, target_bytes // max(1, channels * lane * itemsize))
    if num_rows <= max_rows:
        return num_rows                      # full extent: always legal
    t = (max_rows // 8) * 8
    while t >= 8:
        if num_rows % t == 0:
            return t
        t -= 8
    # TODO(synk): no small 8-multiple divisor; fall back to full extent
    # (legal, but may need a raised vmem_limit for exotic huge shapes).
    return num_rows


def multi_task_loss(seg_pred, grade_pred, subtype_pred,
                    seg_true, grade_true, subtype_true, log_vars):
    """Pallas implementation of MultiTaskLoss.forward."""
    N, C, H, W = seg_pred.shape
    P = H * W
    itemsize = max(jnp.dtype(seg_pred.dtype).itemsize,
                   jnp.dtype(seg_true.dtype).itemsize)

    if P % 128 == 0:
        lane = 128                            # dense lane tiling
    else:
        # TODO(synk): odd spatial sizes fall back to one full pixel row per
        # step (still legal: block equals full array extent on minor dims).
        lane = P
    rows = P // lane
    row_tile = _pick_row_tile(rows, C, lane, itemsize)
    grid = (N, rows // row_tile)

    # Free reshape (contiguous minor dims split): no transpose, no dtype cast.
    seg_pred_4d = seg_pred.reshape(N, C, rows, lane)
    seg_true_4d = seg_true.reshape(N, C, rows, lane)

    K = subtype_pred.shape[1]
    sub_onehot = jax.nn.one_hot(subtype_true, K, dtype=jnp.float32)

    gp = grade_pred.reshape(1, -1)            # squeeze -> row vector on lanes
    gt = grade_true.reshape(1, -1)
    lv = log_vars.reshape(1, 3)

    seg_spec = pl.BlockSpec((None, C, row_tile, lane),
                            lambda n, t: (n, 0, t, 0))

    def _resident(shape):
        # Tiny side inputs: full-extent block, constant index (fetched once).
        return pl.BlockSpec(shape, lambda n, t, _nd=len(shape): (0,) * _nd)

    in_specs = [
        seg_spec,                               # seg_pred (N, C, rows, lane)
        seg_spec,                               # seg_true (N, C, rows, lane)
        _resident(subtype_pred.shape),          # (N, K) logits
        _resident(sub_onehot.shape),            # (N, K) one-hot
        _resident(gp.shape),                    # (1, N)
        _resident(gt.shape),                    # (1, N)
        _resident(lv.shape),                    # (1, 3)
    ]
    out_specs = tuple(pl.BlockSpec((1, 1), lambda n, t: (0, 0))
                      for _ in range(4))
    out_shape = tuple(jax.ShapeDtypeStruct((1, 1), jnp.float32)
                      for _ in range(4))

    seg_bytes = (seg_pred.size * jnp.dtype(seg_pred.dtype).itemsize
                 + seg_true.size * jnp.dtype(seg_true.dtype).itemsize)
    cost = pl.CostEstimate(flops=10 * seg_pred.size,
                           transcendentals=seg_pred.size,
                           bytes_accessed=int(seg_bytes))

    total, dice, ce, mse = pl.pallas_call(
        _multi_task_loss_kernel,
        out_shape=out_shape,
        grid_spec=pltpu.PrefetchScalarGridSpec(
            num_scalar_prefetch=0,
            grid=grid,
            in_specs=in_specs,
            out_specs=out_specs,
            scratch_shapes=[pltpu.VMEM((1, lane), jnp.float32)] * 3,
        ),
        compiler_params=pltpu.CompilerParams(
            dimension_semantics=("arbitrary", "arbitrary")),
        cost_estimate=cost,
    )(seg_pred_4d, seg_true_4d, subtype_pred, sub_onehot, gp, gt, lv)

    return total[0, 0], {"Dice": dice[0, 0], "CE": ce[0, 0], "MSE": mse[0, 0]}


def _reference_loss(seg_pred, grade_pred, subtype_pred,
                    seg_true, grade_true, subtype_true, log_vars):
    """Pure-JAX reference matching the PyTorch semantics."""
    soft = jax.nn.softmax(seg_pred.astype(jnp.float32), axis=1)
    dice = 1.0 - (2.0 * jnp.sum(soft * seg_true) + 1e-8) / (
        jnp.sum(soft) + jnp.sum(seg_true) + 1e-8)
    logp = jax.nn.log_softmax(subtype_pred.astype(jnp.float32), axis=-1)
    ce = -jnp.mean(jnp.take_along_axis(logp, subtype_true[:, None], axis=1))
    mse = jnp.mean((jnp.squeeze(grade_pred) - grade_true) ** 2)
    prec = jnp.exp(-log_vars)
    total = (prec[0] * dice + log_vars[0]
             + prec[1] * ce + log_vars[1]
             + prec[2] * mse + log_vars[2])
    return total, dice, ce, mse


if __name__ == "__main__":
    # Small deterministic inputs consistent with the module's forward.
    N, C, H, W = 2, 4, 16, 16      # segmentation: 4 classes
    K = 3                          # subtype classes

    key = jax.random.PRNGKey(0)
    k1, k2, k3, k4, k5, k6 = jax.random.split(key, 6)

    seg_pred = jax.random.normal(k1, (N, C, H, W), dtype=jnp.float32)
    seg_labels = jax.random.randint(k2, (N, H, W), 0, C)
    seg_true = jnp.transpose(jax.nn.one_hot(seg_labels, C, dtype=jnp.float32),
                             (0, 3, 1, 2))                       # NCHW one-hot
    grade_pred = jax.random.normal(k3, (N, 1), dtype=jnp.float32)
    grade_true = jax.random.normal(k4, (N,), dtype=jnp.float32)
    subtype_pred = jax.random.normal(k5, (N, K), dtype=jnp.float32)
    subtype_true = jax.random.randint(k6, (N,), 0, K)

    # nn.Parameter(torch.zeros(3)) — deterministic init.
    log_vars = jnp.zeros((3,), dtype=jnp.float32)

    total, parts = multi_task_loss(seg_pred, grade_pred, subtype_pred,
                                   seg_true, grade_true, subtype_true, log_vars)
    total = jax.block_until_ready(total)

    ref_total, ref_dice, ref_ce, ref_mse = _reference_loss(
        seg_pred, grade_pred, subtype_pred, seg_true, grade_true,
        subtype_true, log_vars)

    assert jnp.allclose(total, ref_total, rtol=1e-5, atol=1e-5), (total, ref_total)
    assert jnp.allclose(parts["Dice"], ref_dice, rtol=1e-5, atol=1e-5)
    assert jnp.allclose(parts["CE"], ref_ce, rtol=1e-5, atol=1e-5)
    assert jnp.allclose(parts["MSE"], ref_mse, rtol=1e-5, atol=1e-5)

    print("KERNEL_OK")
</pallas_src>

<mosaic_0001>
module attributes {stable_mosaic.version = 11 : i64} {
  func.func @_multi_task_loss_kernel(%arg0: i32, %arg1: i32, %arg2: memref<1x4x2x128xf32, #tpu.memory_space<vmem>>, %arg3: memref<1x4x2x128xf32, #tpu.memory_space<vmem>>, %arg4: memref<2x3xf32, #tpu.memory_space<vmem>>, %arg5: memref<2x3xf32, #tpu.memory_space<vmem>>, %arg6: memref<1x2xf32, #tpu.memory_space<vmem>>, %arg7: memref<1x2xf32, #tpu.memory_space<vmem>>, %arg8: memref<1x3xf32, #tpu.memory_space<vmem>>, %arg9: memref<1x1xf32, #tpu.memory_space<vmem>>, %arg10: memref<1x1xf32, #tpu.memory_space<vmem>>, %arg11: memref<1x1xf32, #tpu.memory_space<vmem>>, %arg12: memref<1x1xf32, #tpu.memory_space<vmem>>, %arg13: memref<1x128xf32, #tpu.memory_space<vmem>>, %arg14: memref<1x128xf32, #tpu.memory_space<vmem>>, %arg15: memref<1x128xf32, #tpu.memory_space<vmem>>) attributes {dimension_semantics = [#tpu.dimension_semantics<arbitrary>, #tpu.dimension_semantics<arbitrary>], iteration_bounds = array<i64: 2, 1>, scalar_prefetch = 0 : i64, scratch_operands = 3 : i64, tpu.core_type = #tpu.core_type<tc>, window_params = [{transform_indices = @transform_0, window_bounds = array<i64: 1, 4, 2, 128>}, {transform_indices = @transform_1, window_bounds = array<i64: 1, 4, 2, 128>}, {pipeline_mode = #tpu.pipeline_mode<synchronous>, transform_indices = @transform_2, window_bounds = array<i64: 2, 3>}, {pipeline_mode = #tpu.pipeline_mode<synchronous>, transform_indices = @transform_3, window_bounds = array<i64: 2, 3>}, {pipeline_mode = #tpu.pipeline_mode<synchronous>, transform_indices = @transform_4, window_bounds = array<i64: 1, 2>}, {pipeline_mode = #tpu.pipeline_mode<synchronous>, transform_indices = @transform_5, window_bounds = array<i64: 1, 2>}, {pipeline_mode = #tpu.pipeline_mode<synchronous>, transform_indices = @transform_6, window_bounds = array<i64: 1, 3>}, {pipeline_mode = #tpu.pipeline_mode<synchronous>, transform_indices = @transform_7, window_bounds = array<i64: 1, 1>}, {pipeline_mode = #tpu.pipeline_mode<synchronous>, transform_indices = @transform_8, window_bounds = array<i64: 1, 1>}, {pipeline_mode = #tpu.pipeline_mode<synchronous>, transform_indices = @transform_9, window_bounds = array<i64: 1, 1>}, {pipeline_mode = #tpu.pipeline_mode<synchronous>, transform_indices = @transform_10, window_bounds = array<i64: 1, 1>}]} {
    %c0_i32 = arith.constant 0 : i32
    %0 = arith.cmpi eq, %arg0, %c0_i32 : i32
    %c0_i32_0 = arith.constant 0 : i32
    %1 = arith.cmpi eq, %arg1, %c0_i32_0 : i32
    %2 = arith.andi %0, %1 : i1
    %c1_i32 = arith.constant 1 : i32
    %3 = arith.cmpi eq, %arg0, %c1_i32 : i32
    %c0_i32_1 = arith.constant 0 : i32
    %4 = arith.cmpi eq, %arg1, %c0_i32_1 : i32
    %5 = arith.andi %3, %4 : i1
    %6 = arith.extui %2 : i1 to i32
    %c0_i32_2 = arith.constant 0 : i32
    %7 = arith.cmpi ne, %6, %c0_i32_2 : i32
    scf.if %7 {
      %cst_30 = arith.constant 0.000000e+00 : f32
      %42 = vector.broadcast %cst_30 : f32 to vector<1x128xf32>
      %c0_31 = arith.constant 0 : index
      %c0_32 = arith.constant 0 : index
      %43 = vector.load %arg13[%c0_31, %c0_32] : memref<1x128xf32, #tpu.memory_space<vmem>>, vector<1x128xf32>
      tpu.vector_store %arg13[%c0_31, %c0_32], %42 {strides = array<i32>} : memref<1x128xf32, #tpu.memory_space<vmem>>, vector<1x128xf32>,
      %cst_33 = arith.constant 0.000000e+00 : f32
      %44 = vector.broadcast %cst_33 : f32 to vector<1x128xf32>
      %c0_34 = arith.constant 0 : index
      %c0_35 = arith.constant 0 : index
      %45 = vector.load %arg14[%c0_34, %c0_35] : memref<1x128xf32, #tpu.memory_space<vmem>>, vector<1x128xf32>
      tpu.vector_store %arg14[%c0_34, %c0_35], %44 {strides = array<i32>} : memref<1x128xf32, #tpu.memory_space<vmem>>, vector<1x128xf32>,
      %cst_36 = arith.constant 0.000000e+00 : f32
      %46 = vector.broadcast %cst_36 : f32 to vector<1x128xf32>
      %c0_37 = arith.constant 0 : index
      %c0_38 = arith.constant 0 : index
      %47 = vector.load %arg15[%c0_37, %c0_38] : memref<1x128xf32, #tpu.memory_space<vmem>>, vector<1x128xf32>
      tpu.vector_store %arg15[%c0_37, %c0_38], %46 {strides = array<i32>} : memref<1x128xf32, #tpu.memory_space<vmem>>, vector<1x128xf32>,
    } else {
    }
    %c0 = arith.constant 0 : index
    %c0_3 = arith.constant 0 : index
    %c0_4 = arith.constant 0 : index
    %c0_5 = arith.constant 0 : index
    %8 = vector.load %arg2[%c0, %c0_3, %c0_4, %c0_5] : memref<1x4x2x128xf32, #tpu.memory_space<vmem>>, vector<1x4x2x128xf32>
    %9 = vector.shape_cast %8 : vector<1x4x2x128xf32> to vector<4x2x128xf32>
    %c0_6 = arith.constant 0 : index
    %c0_7 = arith.constant 0 : index
    %c0_8 = arith.constant 0 : index
    %c0_9 = arith.constant 0 : index
    %10 = vector.load %arg3[%c0_6, %c0_7, %c0_8, %c0_9] : memref<1x4x2x128xf32, #tpu.memory_space<vmem>>, vector<1x4x2x128xf32>
    %11 = vector.shape_cast %10 : vector<1x4x2x128xf32> to vector<4x2x128xf32>
    %cst = arith.constant dense<0xFF800000> : vector<2x128xf32>
    %12 = vector.multi_reduction <maximumf>, %9, %cst [0] : vector<4x2x128xf32> to vector<2x128xf32>
    %13 = vector.shape_cast %12 : vector<2x128xf32> to vector<1x2x128xf32>
    %14 = vector.broadcast %13 : vector<1x2x128xf32> to vector<4x2x128xf32>
    %15 = arith.subf %9, %14 : vector<4x2x128xf32>
    %16 = math.exp %15 : vector<4x2x128xf32>
    %cst_10 = arith.constant dense<0.000000e+00> : vector<2x128xf32>
    %17 = vector.multi_reduction <add>, %16, %cst_10 [0] : vector<4x2x128xf32> to vector<2x128xf32>
    %cst_11 = arith.constant 1.000000e+00 : f32
    %18 = vector.broadcast %cst_11 : f32 to vector<2x128xf32>
    %19 = arith.divf %18, %17 : vector<2x128xf32>
    %20 = arith.mulf %16, %11 : vector<4x2x128xf32>
    %cst_12 = arith.constant dense<0.000000e+00> : vector<2x128xf32>
    %21 = vector.multi_reduction <add>, %20, %cst_12 [0] : vector<4x2x128xf32> to vector<2x128xf32>
    %22 = arith.mulf %21, %19 : vector<2x128xf32>
    %23 = arith.mulf %17, %19 : vector<2x128xf32>
    %cst_13 = arith.constant dense<0.000000e+00> : vector<2x128xf32>
    %24 = vector.multi_reduction <add>, %11, %cst_13 [0] : vector<4x2x128xf32> to vector<2x128xf32>
    %c0_14 = arith.constant 0 : index
    %c0_15 = arith.constant 0 : index
    %25 = vector.load %arg13[%c0_14, %c0_15] : memref<1x128xf32, #tpu.memory_space<vmem>>, vector<1x128xf32>
    %cst_16 = arith.constant dense<0.000000e+00> : vector<128xf32>
    %26 = vector.multi_reduction <add>, %22, %cst_16 [0] : vector<2x128xf32> to vector<128xf32>
    %27 = vector.shape_cast %26 : vector<128xf32> to vector<1x128xf32>
    %28 = arith.addf %25, %27 : vector<1x128xf32>
    %c0_17 = arith.constant 0 : index
    %c0_18 = arith.constant 0 : index
    %29 = vector.load %arg13[%c0_17, %c0_18] : memref<1x128xf32, #tpu.memory_space<vmem>>, vector<1x128xf32>
    tpu.vector_store %arg13[%c0_17, %c0_18], %28 {strides = array<i32>} : memref<1x128xf32, #tpu.memory_space<vmem>>, vector<1x128xf32>,
    %c0_19 = arith.constant 0 : index
    %c0_20 = arith.constant 0 : index
    %30 = vector.load %arg14[%c0_19, %c0_20] : memref<1x128xf32, #tpu.memory_space<vmem>>, vector<1x128xf32>
    %cst_21 = arith.constant dense<0.000000e+00> : vector<128xf32>
    %31 = vector.multi_reduction <add>, %23, %cst_21 [0] : vector<2x128xf32> to vector<128xf32>
    %32 = vector.shape_cast %31 : vector<128xf32> to vector<1x128xf32>
    %33 = arith.addf %30, %32 : vector<1x128xf32>
    %c0_22 = arith.constant 0 : index
    %c0_23 = arith.constant 0 : index
    %34 = vector.load %arg14[%c0_22, %c0_23] : memref<1x128xf32, #tpu.memory_space<vmem>>, vector<1x128xf32>
    tpu.vector_store %arg14[%c0_22, %c0_23], %33 {strides = array<i32>} : memref<1x128xf32, #tpu.memory_space<vmem>>, vector<1x128xf32>,
    %c0_24 = arith.constant 0 : index
    %c0_25 = arith.constant 0 : index
    %35 = vector.load %arg15[%c0_24, %c0_25] : memref<1x128xf32, #tpu.memory_space<vmem>>, vector<1x128xf32>
    %cst_26 = arith.constant dense<0.000000e+00> : vector<128xf32>
    %36 = vector.multi_reduction <add>, %24, %cst_26 [0] : vector<2x128xf32> to vector<128xf32>
    %37 = vector.shape_cast %36 : vector<128xf32> to vector<1x128xf32>
    %38 = arith.addf %35, %37 : vector<1x128xf32>
    %c0_27 = arith.constant 0 : index
    %c0_28 = arith.constant 0 : index
    %39 = vector.load %arg15[%c0_27, %c0_28] : memref<1x128xf32, #tpu.memory_space<vmem>>, vector<1x128xf32>
    tpu.vector_store %arg15[%c0_27, %c0_28], %38 {strides = array<i32>} : memref<1x128xf32, #tpu.memory_space<vmem>>, vector<1x128xf32>,
    %40 = arith.extui %5 : i1 to i32
    %c0_i32_29 = arith.constant 0 : i32
    %41 = arith.cmpi ne, %40, %c0_i32_29 : i32
    scf.if %41 {
      %c0_30 = arith.constant 0 : index
      %c0_31 = arith.constant 0 : index
      %42 = vector.load %arg13[%c0_30, %c0_31] : memref<1x128xf32, #tpu.memory_space<vmem>>, vector<1x128xf32>
      %43 = vector.shape_cast %42 : vector<1x128xf32> to vector<1x1x128xf32>
      %cst_32 = arith.constant dense<0.000000e+00> : vector<1xf32>
      %44 = vector.multi_reduction <add>, %43, %cst_32 [1, 2] : vector<1x1x128xf32> to vector<1xf32>
      %45 = vector.shape_cast %44 : vector<1xf32> to vector<1x1x1xf32>
      %46 = vector.extract %45[0, 0, 0] : f32 from vector<1x1x1xf32>
      %47 = vector.broadcast %46 : f32 to vector<1x1xf32>
      %c0_33 = arith.constant 0 : index
      %c0_34 = arith.constant 0 : index
      %48 = vector.load %arg14[%c0_33, %c0_34] : memref<1x128xf32, #tpu.memory_space<vmem>>, vector<1x128xf32>
      %49 = vector.shape_cast %48 : vector<1x128xf32> to vector<1x1x128xf32>
      %cst_35 = arith.constant dense<0.000000e+00> : vector<1xf32>
      %50 = vector.multi_reduction <add>, %49, %cst_35 [1, 2] : vector<1x1x128xf32> to vector<1xf32>
      %51 = vector.shape_cast %50 : vector<1xf32> to vector<1x1x1xf32>
      %52 = vector.extract %51[0, 0, 0] : f32 from vector<1x1x1xf32>
      %53 = vector.broadcast %52 : f32 to vector<1x1xf32>
      %c0_36 = arith.constant 0 : index
      %c0_37 = arith.constant 0 : index
      %54 = vector.load %arg15[%c0_36, %c0_37] : memref<1x128xf32, #tpu.memory_space<vmem>>, vector<1x128xf32>
      %55 = vector.shape_cast %54 : vector<1x128xf32> to vector<1x1x128xf32>
      %cst_38 = arith.constant dense<0.000000e+00> : vector<1xf32>
      %56 = vector.multi_reduction <add>, %55, %cst_38 [1, 2] : vector<1x1x128xf32> to vector<1xf32>
      %57 = vector.shape_cast %56 : vector<1xf32> to vector<1x1x1xf32>
      %58 = vector.extract %57[0, 0, 0] : f32 from vector<1x1x1xf32>
      %59 = vector.broadcast %58 : f32 to vector<1x1xf32>
      %cst_39 = arith.constant 2.000000e+00 : f32
      %60 = vector.broadcast %cst_39 : f32 to vector<1x1xf32>
      %61 = arith.mulf %60, %47 : vector<1x1xf32>
      %cst_40 = arith.constant 9.99999993E-9 : f32
      %62 = vector.broadcast %cst_40 : f32 to vector<1x1xf32>
      %63 = arith.addf %61, %62 : vector<1x1xf32>
      %64 = arith.addf %53, %59 : vector<1x1xf32>
      %cst_41 = arith.constant 9.99999993E-9 : f32
      %65 = vector.broadcast %cst_41 : f32 to vector<1x1xf32>
      %66 = arith.addf %64, %65 : vector<1x1xf32>
      %67 = arith.divf %63, %66 : vector<1x1xf32>
      %cst_42 = arith.constant 1.000000e+00 : f32
      %68 = vector.broadcast %cst_42 : f32 to vector<1x1xf32>
      %69 = arith.subf %68, %67 : vector<1x1xf32>
      %c0_43 = arith.constant 0 : index
      %c0_44 = arith.constant 0 : index
      %70 = vector.load %arg4[%c0_43, %c0_44] : memref<2x3xf32, #tpu.memory_space<vmem>>, vector<2x3xf32>
      %cst_45 = arith.constant dense<0xFF800000> : vector<2xf32>
      %71 = vector.multi_reduction <maximumf>, %70, %cst_45 [1] : vector<2x3xf32> to vector<2xf32>
      %72 = vector.shape_cast %71 : vector<2xf32> to vector<2x1xf32>
      %73 = vector.broadcast %72 : vector<2x1xf32> to vector<2x3xf32>
      %74 = arith.subf %70, %73 : vector<2x3xf32>
      %75 = math.exp %74 : vector<2x3xf32>
      %cst_46 = arith.constant dense<0.000000e+00> : vector<2xf32>
      %76 = vector.multi_reduction <add>, %75, %cst_46 [1] : vector<2x3xf32> to vector<2xf32>
      %77 = vector.shape_cast %76 : vector<2xf32> to vector<2x1xf32>
      %78 = math.log %77 : vector<2x1xf32>
      %79 = arith.addf %78, %72 : vector<2x1xf32>
      %c0_47 = arith.constant 0 : index
      %c0_48 = arith.constant 0 : index
      %80 = vector.load %arg5[%c0_47, %c0_48] : memref<2x3xf32, #tpu.memory_space<vmem>>, vector<2x3xf32>
      %81 = vector.broadcast %79 : vector<2x1xf32> to vector<2x3xf32>
      %82 = arith.subf %70, %81 : vector<2x3xf32>
      %83 = arith.mulf %80, %82 : vector<2x3xf32>
      %84 = vector.shape_cast %83 : vector<2x3xf32> to vector<1x2x3xf32>
      %cst_49 = arith.constant dense<0.000000e+00> : vector<1xf32>
      %85 = vector.multi_reduction <add>, %84, %cst_49 [1, 2] : vector<1x2x3xf32> to vector<1xf32>
      %86 = vector.shape_cast %85 : vector<1xf32> to vector<1x1x1xf32>
      %87 = vector.extract %86[0, 0, 0] : f32 from vector<1x1x1xf32>
      %88 = vector.broadcast %87 : f32 to vector<1x1xf32>
      %cst_50 = arith.constant 0.000000e+00 : f32
      %89 = vector.broadcast %cst_50 : f32 to vector<1x1xf32>
      %90 = arith.subf %89, %88 : vector<1x1xf32>
      %cst_51 = arith.constant 2.000000e+00 : f32
      %91 = vector.broadcast %cst_51 : f32 to vector<1x1xf32>
      %92 = arith.divf %90, %91 : vector<1x1xf32>
      %c0_52 = arith.constant 0 : index
      %c0_53 = arith.constant 0 : index
      %93 = vector.load %arg6[%c0_52, %c0_53] : memref<1x2xf32, #tpu.memory_space<vmem>>, vector<1x2xf32>
      %c0_54 = arith.constant 0 : index
      %c0_55 = arith.constant 0 : index
      %94 = vector.load %arg7[%c0_54, %c0_55] : memref<1x2xf32, #tpu.memory_space<vmem>>, vector<1x2xf32>
      %95 = arith.subf %93, %94 : vector<1x2xf32>
      %96 = arith.mulf %95, %95 : vector<1x2xf32>
      %97 = vector.shape_cast %96 : vector<1x2xf32> to vector<1x1x2xf32>
      %cst_56 = arith.constant dense<0.000000e+00> : vector<1xf32>
      %98 = vector.multi_reduction <add>, %97, %cst_56 [1, 2] : vector<1x1x2xf32> to vector<1xf32>
      %99 = vector.shape_cast %98 : vector<1xf32> to vector<1x1x1xf32>
      %100 = vector.extract %99[0, 0, 0] : f32 from vector<1x1x1xf32>
      %101 = vector.broadcast %100 : f32 to vector<1x1xf32>
      %cst_57 = arith.constant 2.000000e+00 : f32
      %102 = vector.broadcast %cst_57 : f32 to vector<1x1xf32>
      %103 = arith.divf %101, %102 : vector<1x1xf32>
      %c0_58 = arith.constant 0 : index
      %c0_59 = arith.constant 0 : index
      %104 = vector.load %arg8[%c0_58, %c0_59] : memref<1x3xf32, #tpu.memory_space<vmem>>, vector<1x3xf32>
      %cst_60 = arith.constant 0.000000e+00 : f32
      %105 = vector.broadcast %cst_60 : f32 to vector<1x3xf32>
      %106 = arith.subf %105, %104 : vector<1x3xf32>
      %107 = math.exp %106 : vector<1x3xf32>
      %108 = vector.extract_strided_slice %107 {offsets = [0, 0], sizes = [1, 1], strides = [1, 1]} : vector<1x3xf32> to vector<1x1xf32>
      %109 = arith.mulf %108, %69 : vector<1x1xf32>
      %110 = vector.extract_strided_slice %104 {offsets = [0, 0], sizes = [1, 1], strides = [1, 1]} : vector<1x3xf32> to vector<1x1xf32>
      %111 = arith.addf %109, %110 : vector<1x1xf32>
      %112 = vector.extract_strided_slice %107 {offsets = [0, 1], sizes = [1, 1], strides = [1, 1]} : vector<1x3xf32> to vector<1x1xf32>
      %113 = arith.mulf %112, %92 : vector<1x1xf32>
      %114 = arith.addf %111, %113 : vector<1x1xf32>
      %115 = vector.extract_strided_slice %104 {offsets = [0, 1], sizes = [1, 1], strides = [1, 1]} : vector<1x3xf32> to vector<1x1xf32>
      %116 = arith.addf %114, %115 : vector<1x1xf32>
      %117 = vector.extract_strided_slice %107 {offsets = [0, 2], sizes = [1, 1], strides = [1, 1]} : vector<1x3xf32> to vector<1x1xf32>
      %118 = arith.mulf %117, %103 : vector<1x1xf32>
      %119 = arith.addf %116, %118 : vector<1x1xf32>
      %120 = vector.extract_strided_slice %104 {offsets = [0, 2], sizes = [1, 1], strides = [1, 1]} : vector<1x3xf32> to vector<1x1xf32>
      %121 = arith.addf %119, %120 : vector<1x1xf32>
      %c0_61 = arith.constant 0 : index
      %c0_62 = arith.constant 0 : index
      %122 = vector.load %arg9[%c0_61, %c0_62] : memref<1x1xf32, #tpu.memory_space<vmem>>, vector<1x1xf32>
      tpu.vector_store %arg9[%c0_61, %c0_62], %121 {strides = array<i32>} : memref<1x1xf32, #tpu.memory_space<vmem>>, vector<1x1xf32>,
      %c0_63 = arith.constant 0 : index
      %c0_64 = arith.constant 0 : index
      %123 = vector.load %arg10[%c0_63, %c0_64] : memref<1x1xf32, #tpu.memory_space<vmem>>, vector<1x1xf32>
      tpu.vector_store %arg10[%c0_63, %c0_64], %69 {strides = array<i32>} : memref<1x1xf32, #tpu.memory_space<vmem>>, vector<1x1xf32>,
      %c0_65 = arith.constant 0 : index
      %c0_66 = arith.constant 0 : index
      %124 = vector.load %arg11[%c0_65, %c0_66] : memref<1x1xf32, #tpu.memory_space<vmem>>, vector<1x1xf32>
      tpu.vector_store %arg11[%c0_65, %c0_66], %92 {strides = array<i32>} : memref<1x1xf32, #tpu.memory_space<vmem>>, vector<1x1xf32>,
      %c0_67 = arith.constant 0 : index
      %c0_68 = arith.constant 0 : index
      %125 = vector.load %arg12[%c0_67, %c0_68] : memref<1x1xf32, #tpu.memory_space<vmem>>, vector<1x1xf32>
      tpu.vector_store %arg12[%c0_67, %c0_68], %103 {strides = array<i32>} : memref<1x1xf32, #tpu.memory_space<vmem>>, vector<1x1xf32>,
    } else {
    }
    return
  }
  func.func @transform_0(%arg0: i32, %arg1: i32) -> (i32, i32, i32, i32) {
    %c0_i32 = arith.constant 0 : i32
    %c0_i32_0 = arith.constant 0 : i32
    %c0_i32_1 = arith.constant 0 : i32
    return %arg0, %c0_i32, %arg1, %c0_i32_0 : i32, i32, i32, i32
  }
  func.func @transform_1(%arg0: i32, %arg1: i32) -> (i32, i32, i32, i32) {
    %c0_i32 = arith.constant 0 : i32
    %c0_i32_0 = arith.constant 0 : i32
    %c0_i32_1 = arith.constant 0 : i32
    return %arg0, %c0_i32, %arg1, %c0_i32_0 : i32, i32, i32, i32
  }
  func.func @transform_2(%arg0: i32, %arg1: i32) -> (i32, i32) {
    %c0_i32 = arith.constant 0 : i32
    %c0_i32_0 = arith.constant 0 : i32
    %c0_i32_1 = arith.constant 0 : i32
    return %c0_i32, %c0_i32_0 : i32, i32
  }
  func.func @transform_3(%arg0: i32, %arg1: i32) -> (i32, i32) {
    %c0_i32 = arith.constant 0 : i32
    %c0_i32_0 = arith.constant 0 : i32
    %c0_i32_1 = arith.constant 0 : i32
    return %c0_i32, %c0_i32_0 : i32, i32
  }
  func.func @transform_4(%arg0: i32, %arg1: i32) -> (i32, i32) {
    %c0_i32 = arith.constant 0 : i32
    %c0_i32_0 = arith.constant 0 : i32
    %c0_i32_1 = arith.constant 0 : i32
    return %c0_i32, %c0_i32_0 : i32, i32
  }
  func.func @transform_5(%arg0: i32, %arg1: i32) -> (i32, i32) {
    %c0_i32 = arith.constant 0 : i32
    %c0_i32_0 = arith.constant 0 : i32
    %c0_i32_1 = arith.constant 0 : i32
    return %c0_i32, %c0_i32_0 : i32, i32
  }
  func.func @transform_6(%arg0: i32, %arg1: i32) -> (i32, i32) {
    %c0_i32 = arith.constant 0 : i32
    %c0_i32_0 = arith.constant 0 : i32
    %c0_i32_1 = arith.constant 0 : i32
    return %c0_i32, %c0_i32_0 : i32, i32
  }
  func.func @transform_7(%arg0: i32, %arg1: i32) -> (i32, i32) {
    %c0_i32 = arith.constant 0 : i32
    %c0_i32_0 = arith.constant 0 : i32
    %c0_i32_1 = arith.constant 0 : i32
    return %c0_i32, %c0_i32_0 : i32, i32
  }
  func.func @transform_8(%arg0: i32, %arg1: i32) -> (i32, i32) {
    %c0_i32 = arith.constant 0 : i32
    %c0_i32_0 = arith.constant 0 : i32
    %c0_i32_1 = arith.constant 0 : i32
    return %c0_i32, %c0_i32_0 : i32, i32
  }
  func.func @transform_9(%arg0: i32, %arg1: i32) -> (i32, i32) {
    %c0_i32 = arith.constant 0 : i32
    %c0_i32_0 = arith.constant 0 : i32
    %c0_i32_1 = arith.constant 0 : i32
    return %c0_i32, %c0_i32_0 : i32, i32
  }
  func.func @transform_10(%arg0: i32, %arg1: i32) -> (i32, i32) {
    %c0_i32 = arith.constant 0 : i32
    %c0_i32_0 = arith.constant 0 : i32
    %c0_i32_1 = arith.constant 0 : i32
    return %c0_i32, %c0_i32_0 : i32, i32
  }
}

</mosaic_0001>

<llo_original>
// kernel: tpu_custom_call.1
$region0: #{tpu_custom_call.1}
  #allocation0 [shape = 'u32[]', space=smem, size = 0x4, offset = 0x4, fixed_abs, tag = 'smem constant byte address 0x4 - core index']
  #allocation1 [shape = 'u32[72,128]{1,0:T(1,128)}', space=vmem, size = 0x9000, scoped, tag = 'internal scratch']
  #allocation2 [shape = 'f32[1,128]{1,0:T(1,128)}', space=vmem, size = 0x200, scoped, tag = 'scratch operand']
  #allocation3 [shape = 'f32[1,128]{1,0:T(1,128)}', space=vmem, size = 0x200, scoped, tag = 'scratch operand']
  #allocation4 [shape = 'f32[1,128]{1,0:T(1,128)}', space=vmem, size = 0x200, scoped, tag = 'scratch operand']
  %s0 = inlined_call_operand.hbm [shape: f32[2,4,2,128], index: 0, kind: input, shape index: {}]
  %s1 = inlined_call_operand.hbm [shape: f32[2,4,2,128], index: 1, kind: input, shape index: {}]
  %s2 = inlined_call_operand.hbm [shape: f32[2,3], index: 2, kind: input, shape index: {}]
  %s3 = inlined_call_operand.vmem [shape: f32[2,3], index: 3, kind: input, shape index: {}]
  %s4 = inlined_call_operand.vmem [shape: f32[1,2], index: 4, kind: input, shape index: {}]
  %s5 = inlined_call_operand.vmem [shape: f32[1,2], index: 5, kind: input, shape index: {}]
  %s6 = inlined_call_operand.vmem [shape: f32[1,3], index: 6, kind: input, shape index: {}]
  %s7 = inlined_call_operand.hbm [shape: f32[1,1], index: 7, kind: output, shape index: {0}]
  %s8 = inlined_call_operand.hbm [shape: f32[1,1], index: 8, kind: output, shape index: {1}]
  %s9 = inlined_call_operand.hbm [shape: f32[1,1], index: 9, kind: output, shape index: {2}]
  %s10 = inlined_call_operand.hbm [shape: f32[1,1], index: 10, kind: output, shape index: {3}]
  %11 = xla_tuple %s7, %s8, %s9, %s10
  %s12 = sld [smem:[#allocation0]]
  $region105: #{tpu_custom_call.1} parent=0
    _
  %s14 = ssub.s32 1, %s12
  %s15 = scalar_select 0, %s14, %s12
  $region1: #{tpu_custom_call.1} parent=0
    #allocation5 [shape = 'u8[8192]{0}', space=vmem, size = 0x2000, scoped, tag = 'input window, operand 0']
    #allocation6 [shape = 's32[2]{0}', space=sflag, size = 0x8, scoped, tag = 'scoped memory for tpu_custom_call.1']
    #allocation7 [shape = 's32[2]{0}', space=sflag, size = 0x8, scoped, tag = 'scoped memory for tpu_custom_call.1']
    #allocation8 [shape = 'u8[8192]{0}', space=vmem, size = 0x2000, scoped, tag = 'input window, operand 1']
    #allocation9 [shape = 's32[2]{0}', space=sflag, size = 0x8, scoped, tag = 'scoped memory for tpu_custom_call.1']
    #allocation10 [shape = 'u8[1024]{0}', space=vmem, size = 0x400, scoped, tag = 'input window, operand 2, single buffered']
    #allocation11 [shape = 'u8[512]{0}', space=vmem, size = 0x400, scoped, tag = 'output window, operand 0, single buffered']
    #allocation12 [shape = 'u8[512]{0}', space=vmem, size = 0x400, scoped, tag = 'output window, operand 1, single buffered']
    #allocation13 [shape = 's32[1]{0}', space=sflag, size = 0x4, scoped, tag = 'scoped memory for tpu_custom_call.1']
    #allocation14 [shape = 'u8[512]{0}', space=vmem, size = 0x400, scoped, tag = 'output window, operand 2, single buffered']
    #allocation15 [shape = 'u8[512]{0}', space=vmem, size = 0x400, scoped, tag = 'output window, operand 3, single buffered']
    #allocation16 [shape = 's32[1]{0}', space=sflag, size = 0x4, scoped, tag = 'scoped memory for tpu_custom_call.1']
    %16 = vsyncpa [#allocation6], 0
    %s17 = scalar_lea.sflag [#allocation6], 1
    %18 = vsyncpa %s17, 0
    %19 = vsyncpa [#allocation9], 0
    %s20 = scalar_lea.sflag [#allocation9], 1
    %21 = vsyncpa %s20, 0
    %22 = vsyncpa [#allocation7], 0
    %23 = vsyncpa [#allocation13], 0
    %24 = vsyncpa [#allocation16], 0
    loop: start=0, step=1, limit=4
    $region2: #{tpu_custom_call.1} parent=1 // loop_pre_header
      _
    $region3: #{tpu_custom_call.1} parent=1 // loop_header
      %s26 = sphi 0, %s30
      %p27 = scmp.ge.s32.totalorder %s26, 4
      %s33 = sphi 0, %s45
      %s34 = sphi 0, %s41
      %s35 = sphi 0, %s33
      %s36 = sphi 0, %s34
      %s37 = sphi 0, %s35
      %s38 = sphi 0, %s36
      %s50 = sphi 0, %s52
      %s53 = sphi 0, %s50
      %s54 = sphi 0, %s53
      %s70 = sphi 0, %s54
      %s78 = sphi 0, %s80
      %s81 = sphi 0, %s78
      %s82 = sphi 0, %s81
      %s98 = sphi 0, %s82
      %s102 = sphi 0, %s102
      %s104 = sphi 0, %s102
      %s105 = sphi 0, %s104
      %s119 = sphi 0, %s105
      %s123 = sphi 0, %s123
      %s125 = sphi 0, %s123
      %s126 = sphi 0, %s125
      %s140 = sphi 0, %s126
      %s144 = sphi 0, %s144
      %s146 = sphi 0, %s144
      %s147 = sphi 0, %s146
      %s161 = sphi 0, %s147
      %s165 = sphi 0, %s165
      %s167 = sphi 0, %s165
      %s168 = sphi 0, %s167
      %s182 = sphi 0, %s168
      %s186 = sphi 0, %s186
      %s188 = sphi 0, %s186
      %s189 = sphi 0, %s188
      %s203 = sphi 0, %s189
      %s207 = sphi 0, %s207
      %s209 = sphi 0, %s207
      %s210 = sphi 0, %s209
      %s224 = sphi 0, %s210
      %s228 = sphi 0, %s228
      %s230 = sphi 0, %s228
      %s231 = sphi 0, %s230
      %s245 = sphi 0, %s231
      %s249 = sphi 0, %s249
      %s251 = sphi 0, %s249
      %s252 = sphi 0, %s251
      %s266 = sphi 0, %s252
      %s270 = sphi 0, %s270
      %s272 = sphi 0, %s270
      %s273 = sphi 0, %s272
      %s287 = sphi 0, %s273
    $region4: #{tpu_custom_call.1} parent=1 // loop_header_branch
      %29 = sbr.rel (%p27) target = $region8
    $region5: #{tpu_custom_call.1} parent=1 // loop_body
      %s31 = ssub.s32 %s26, 1
      %s32 = ssub.s32 %s26, 2
      %s39 = sadd.s32 1, %s34
      %p40 = scmp.ge.s32.totalorder %s39, 1
      %s41 = scalar_select %p40, 0, %s39
      %s42 = sadd.s32 1, %s33
      %s43 = scalar_select %p40, %s42, %s33
      %p44 = scmp.ge.s32.totalorder %s43, 2
      %s45 = scalar_select %p44, 0, %s43
      %s46 = ssub.s32 %s33, %s45
      %s47 = ssub.s32 %s34, %s41
      %s48 = sor.u32 %s46, %s47
      %p49 = scmp.eq.s32.totalorder %s48, 0
      %s51 = sadd.s32 %s50, 1
      %s52 = scalar_select %p49, %s50, %s51
      %p55 = pneg %p49
      %p56 = scmp.eq.s32.totalorder %s26, 1
      %p57 = por %p55, %p56
      %p58 = scmp.ne.s32.totalorder %s50, %s53
      %p59 = scmp.eq.s32.totalorder %s26, 0
      %p60 = por %p58, %p59
      %p61 = scmp.ne.s32.totalorder %s50, %s53
      %p62 = scmp.eq.s32.totalorder %s31, 1
      %p63 = por %p61, %p62
      %p64 = scmp.ne.s32.totalorder %s53, %s54
      %p65 = scmp.eq.s32.totalorder %s31, 0
      %p66 = por %p64, %p65
      %p67 = scmp.ne.s32.totalorder %s53, %s54
      %p68 = scmp.eq.s32.totalorder %s32, 1
      %p69 = por %p67, %p68
      %p71 = scmp.ne.s32.totalorder %s54, %s70
      %p72 = scmp.eq.s32.totalorder %s32, 0
      %p73 = por %p71, %p72
      %s74 = ssub.s32 %s33, %s45
      %s75 = ssub.s32 %s34, %s41
      %s76 = sor.u32 %s74, %s75
      %p77 = scmp.eq.s32.totalorder %s76, 0
      %s79 = sadd.s32 %s78, 1
      %s80 = scalar_select %p77, %s78, %s79
      %p83 = pneg %p77
      %p84 = scmp.eq.s32.totalorder %s26, 1
      %p85 = por %p83, %p84
      %p86 = scmp.ne.s32.totalorder %s78, %s81
      %p87 = scmp.eq.s32.totalorder %s26, 0
      %p88 = por %p86, %p87
      %p89 = scmp.ne.s32.totalorder %s78, %s81
      %p90 = scmp.eq.s32.totalorder %s31, 1
      %p91 = por %p89, %p90
      %p92 = scmp.ne.s32.totalorder %s81, %s82
      %p93 = scmp.eq.s32.totalorder %s31, 0
      %p94 = por %p92, %p93
      %p95 = scmp.ne.s32.totalorder %s81, %s82
      %p96 = scmp.eq.s32.totalorder %s32, 1
      %p97 = por %p95, %p96
      %p99 = scmp.ne.s32.totalorder %s82, %s98
      %p100 = scmp.eq.s32.totalorder %s32, 0
      %p101 = por %p99, %p100
      %s103 = sadd.s32 %s102, 1
      %p106 = scmp.eq.s32.totalorder %s26, 1
      %p107 = scmp.ne.s32.totalorder %s102, %s104
      %p108 = scmp.eq.s32.totalorder %s26, 0
      %p109 = por %p107, %p108
      %p110 = scmp.ne.s32.totalorder %s102, %s104
      %p111 = scmp.eq.s32.totalorder %s31, 1
      %p112 = por %p110, %p111
      %p113 = scmp.ne.s32.totalorder %s104, %s105
      %p114 = scmp.eq.s32.totalorder %s31, 0
      %p115 = por %p113, %p114
      %p116 = scmp.ne.s32.totalorder %s104, %s105
      %p117 = scmp.eq.s32.totalorder %s32, 1
      %p118 = por %p116, %p117
      %p120 = scmp.ne.s32.totalorder %s105, %s119
      %p121 = scmp.eq.s32.totalorder %s32, 0
      %p122 = por %p120, %p121
      %s124 = sadd.s32 %s123, 1
      %p127 = scmp.eq.s32.totalorder %s26, 1
      %p128 = scmp.ne.s32.totalorder %s123, %s125
      %p129 = scmp.eq.s32.totalorder %s26, 0
      %p130 = por %p128, %p129
      %p131 = scmp.ne.s32.totalorder %s123, %s125
      %p132 = scmp.eq.s32.totalorder %s31, 1
      %p133 = por %p131, %p132
      %p134 = scmp.ne.s32.totalorder %s125, %s126
      %p135 = scmp.eq.s32.totalorder %s31, 0
      %p136 = por %p134, %p135
      %p137 = scmp.ne.s32.totalorder %s125, %s126
      %p138 = scmp.eq.s32.totalorder %s32, 1
      %p139 = por %p137, %p138
      %p141 = scmp.ne.s32.totalorder %s126, %s140
      %p142 = scmp.eq.s32.totalorder %s32, 0
      %p143 = por %p141, %p142
      %s145 = sadd.s32 %s144, 1
      %p148 = scmp.eq.s32.totalorder %s26, 1
      %p149 = scmp.ne.s32.totalorder %s144, %s146
      %p150 = scmp.eq.s32.totalorder %s26, 0
      %p151 = por %p149, %p150
      %p152 = scmp.ne.s32.totalorder %s144, %s146
      %p153 = scmp.eq.s32.totalorder %s31, 1
      %p154 = por %p152, %p153
      %p155 = scmp.ne.s32.totalorder %s146, %s147
      %p156 = scmp.eq.s32.totalorder %s31, 0
      %p157 = por %p155, %p156
      %p158 = scmp.ne.s32.totalorder %s146, %s147
      %p159 = scmp.eq.s32.totalorder %s32, 1
      %p160 = por %p158, %p159
      %p162 = scmp.ne.s32.totalorder %s147, %s161
      %p163 = scmp.eq.s32.totalorder %s32, 0
      %p164 = por %p162, %p163
      %s166 = sadd.s32 %s165, 1
      %p169 = scmp.eq.s32.totalorder %s26, 1
      %p170 = scmp.ne.s32.totalorder %s165, %s167
      %p171 = scmp.eq.s32.totalorder %s26, 0
      %p172 = por %p170, %p171
      %p173 = scmp.ne.s32.totalorder %s165, %s167
      %p174 = scmp.eq.s32.totalorder %s31, 1
      %p175 = por %p173, %p174
      %p176 = scmp.ne.s32.totalorder %s167, %s168
      %p177 = scmp.eq.s32.totalorder %s31, 0
      %p178 = por %p176, %p177
      %p179 = scmp.ne.s32.totalorder %s167, %s168
      %p180 = scmp.eq.s32.totalorder %s32, 1
      %p181 = por %p179, %p180
      %p183 = scmp.ne.s32.totalorder %s168, %s182
      %p184 = scmp.eq.s32.totalorder %s32, 0
      %p185 = por %p183, %p184
      %s187 = sadd.s32 %s186, 1
      %p190 = scmp.eq.s32.totalorder %s26, 1
      %p191 = scmp.ne.s32.totalorder %s186, %s188
      %p192 = scmp.eq.s32.totalorder %s26, 0
      %p193 = por %p191, %p192
      %p194 = scmp.ne.s32.totalorder %s186, %s188
      %p195 = scmp.eq.s32.totalorder %s31, 1
      %p196 = por %p194, %p195
      %p197 = scmp.ne.s32.totalorder %s188, %s189
      %p198 = scmp.eq.s32.totalorder %s31, 0
      %p199 = por %p197, %p198
      %p200 = scmp.ne.s32.totalorder %s188, %s189
      %p201 = scmp.eq.s32.totalorder %s32, 1
      %p202 = por %p200, %p201
      %p204 = scmp.ne.s32.totalorder %s189, %s203
      %p205 = scmp.eq.s32.totalorder %s32, 0
      %p206 = por %p204, %p205
      %s208 = sadd.s32 %s207, 1
      %p211 = scmp.eq.s32.totalorder %s26, 1
      %p212 = scmp.ne.s32.totalorder %s207, %s209
      %p213 = scmp.eq.s32.totalorder %s26, 0
      %p214 = por %p212, %p213
      %p215 = scmp.ne.s32.totalorder %s207, %s209
      %p216 = scmp.eq.s32.totalorder %s31, 1
      %p217 = por %p215, %p216
      %p218 = scmp.ne.s32.totalorder %s209, %s210
      %p219 = scmp.eq.s32.totalorder %s31, 0
      %p220 = por %p218, %p219
      %p221 = scmp.ne.s32.totalorder %s209, %s210
      %p222 = scmp.eq.s32.totalorder %s32, 1
      %p223 = por %p221, %p222
      %p225 = scmp.ne.s32.totalorder %s210, %s224
      %p226 = scmp.eq.s32.totalorder %s32, 0
      %p227 = por %p225, %p226
      %s229 = sadd.s32 %s228, 1
      %p232 = scmp.eq.s32.totalorder %s26, 1
      %p233 = scmp.ne.s32.totalorder %s228, %s230
      %p234 = scmp.eq.s32.totalorder %s26, 0
      %p235 = por %p233, %p234
      %p236 = scmp.ne.s32.totalorder %s228, %s230
      %p237 = scmp.eq.s32.totalorder %s31, 1
      %p238 = por %p236, %p237
      %p239 = scmp.ne.s32.totalorder %s230, %s231
      %p240 = scmp.eq.s32.totalorder %s31, 0
      %p241 = por %p239, %p240
      %p242 = scmp.ne.s32.totalorder %s230, %s231
      %p243 = scmp.eq.s32.totalorder %s32, 1
      %p244 = por %p242, %p243
      %p246 = scmp.ne.s32.totalorder %s231, %s245
      %p247 = scmp.eq.s32.totalorder %s32, 0
      %p248 = por %p246, %p247
      %s250 = sadd.s32 %s249, 1
      %p253 = scmp.eq.s32.totalorder %s26, 1
      %p254 = scmp.ne.s32.totalorder %s249, %s251
      %p255 = scmp.eq.s32.totalorder %s26, 0
      %p256 = por %p254, %p255
      %p257 = scmp.ne.s32.totalorder %s249, %s251
      %p258 = scmp.eq.s32.totalorder %s31, 1
      %p259 = por %p257, %p258
      %p260 = scmp.ne.s32.totalorder %s251, %s252
      %p261 = scmp.eq.s32.totalorder %s31, 0
      %p262 = por %p260, %p261
      %p263 = scmp.ne.s32.totalorder %s251, %s252
      %p264 = scmp.eq.s32.totalorder %s32, 1
      %p265 = por %p263, %p264
      %p267 = scmp.ne.s32.totalorder %s252, %s266
      %p268 = scmp.eq.s32.totalorder %s32, 0
      %p269 = por %p267, %p268
      %s271 = sadd.s32 %s270, 1
      %p274 = scmp.eq.s32.totalorder %s26, 1
      %p275 = scmp.ne.s32.totalorder %s270, %s272
      %p276 = scmp.eq.s32.totalorder %s26, 0
      %p277 = por %p275, %p276
      %p278 = scmp.ne.s32.totalorder %s270, %s272
      %p279 = scmp.eq.s32.totalorder %s31, 1
      %p280 = por %p278, %p279
      %p281 = scmp.ne.s32.totalorder %s272, %s273
      %p282 = scmp.eq.s32.totalorder %s31, 0
      %p283 = por %p281, %p282
      %p284 = scmp.ne.s32.totalorder %s272, %s273
      %p285 = scmp.eq.s32.totalorder %s32, 1
      %p286 = por %p284, %p285
      %p288 = scmp.ne.s32.totalorder %s273, %s287
      %p289 = scmp.eq.s32.totalorder %s32, 0
      %p290 = por %p288, %p289
      %p291 = scmp.le.s32.totalorder 1, %s26
      %p292 = scmp.lt.s32.totalorder %s26, 3
      %p293 = pnand %p291, %p292
      %p294 = pneg %p293
      // Predicated region
      $region9: #{tpu_custom_call.1} parent=5 // pred_check
        _
      $region10: #{tpu_custom_call.1} parent=5 // pred_check_branch
        %296 = sbr.rel (%p293) target = $region12
      $region11: #{tpu_custom_call.1} parent=5 // pred_region
        %s297 = ssub.s32 %s26, 1
        // Predicated region
        $region13: #{tpu_custom_call.1} parent=11 // pred_check
          %p298 = pneg %p115
        $region14: #{tpu_custom_call.1} parent=11 // pred_check_branch
          %300 = sbr.rel (%p298) target = $region16
        $region15: #{tpu_custom_call.1} parent=11 // pred_region
          %302 = vsyncadd [#allocation9], 0
          %s304 = sshll.u32 %s2, 4
          %s305 = int_to_ptr.hbm [resolvable:$true] %s304
          %s306 = sshll.u32 [#allocation10], 4
          %s307 = int_to_ptr.vmem [resolvable:$true] %s306
          %309 = dma.hbm_to_vmem [thread:$0]  %s305, 32, %s307, [#allocation9]
        $region16: #{tpu_custom_call.1} parent=11 // pred_fallthru
          _
        // Predicated region
        $region17: #{tpu_custom_call.1} parent=11 // pred_check
          %p310 = pneg %p136
        $region18: #{tpu_custom_call.1} parent=11 // pred_check_branch
          %312 = sbr.rel (%p310) target = $region20
        $region19: #{tpu_custom_call.1} parent=11 // pred_region
          _
        $region20: #{tpu_custom_call.1} parent=11 // pred_fallthru
          _
        // Predicated region
        $region21: #{tpu_custom_call.1} parent=11 // pred_check
          %p313 = pneg %p157
        $region22: #{tpu_custom_call.1} parent=11 // pred_check_branch
          %315 = sbr.rel (%p313) target = $region24
        $region23: #{tpu_custom_call.1} parent=11 // pred_region
          _
        $region24: #{tpu_custom_call.1} parent=11 // pred_fallthru
          _
        // Predicated region
        $region25: #{tpu_custom_call.1} parent=11 // pred_check
          %p316 = pneg %p178
        $region26: #{tpu_custom_call.1} parent=11 // pred_check_branch
          %318 = sbr.rel (%p316) target = $region28
        $region27: #{tpu_custom_call.1} parent=11 // pred_region
          _
        $region28: #{tpu_custom_call.1} parent=11 // pred_fallthru
          _
        // Predicated region
        $region29: #{tpu_custom_call.1} parent=11 // pred_check
          %p319 = pneg %p199
        $region30: #{tpu_custom_call.1} parent=11 // pred_check_branch
          %321 = sbr.rel (%p319) target = $region32
        $region31: #{tpu_custom_call.1} parent=11 // pred_region
          _
        $region32: #{tpu_custom_call.1} parent=11 // pred_fallthru
          _
      $region12: #{tpu_custom_call.1} parent=5 // pred_fallthru
        _
      %p322 = scmp.lt.s32.totalorder %s26, 2
      // Predicated region
      $region33: #{tpu_custom_call.1} parent=5 // pred_check
        %p323 = pneg %p322
      $region34: #{tpu_custom_call.1} parent=5 // pred_check_branch
        %325 = sbr.rel (%p323) target = $region36
      $region35: #{tpu_custom_call.1} parent=5 // pred_region
        // Predicated region
        $region37: #{tpu_custom_call.1} parent=35 // pred_check
          %p326 = pneg %p60
        $region38: #{tpu_custom_call.1} parent=35 // pred_check_branch
          %328 = sbr.rel (%p326) target = $region40
        $region39: #{tpu_custom_call.1} parent=35 // pred_region
          %s329 = sand.u32 %s50, 1
          %s330 = scalar_lea.sflag [#allocation6], %s329
          %s331 = sand.u32 %s50, 1
          %s332 = smul.addr %s331, 8
          %s333 = scalar_lea.vmem [#allocation5], %s332
          %335 = vsyncadd %s330, 0
          %s336 = smul.addr %s33, 4
          %s337 = sadd.s32 %s34, %s336
          %s338 = smul.addr %s337, 2
          %s339 = scalar_lea.hbm %s0, %s338
          %s340 = sshll.u32 %s339, 4
          %s341 = int_to_ptr.hbm [resolvable:$true] %s340
          %s342 = sshll.u32 %s333, 4
          %s343 = int_to_ptr.vmem [resolvable:$true] %s342
          %348 = dma.hbm_to_vmem [thread:$0]  %s341, 128, %s343, %s330, 32, 32, 2
        $region40: #{tpu_custom_call.1} parent=35 // pred_fallthru
          _
        // Predicated region
        $region41: #{tpu_custom_call.1} parent=35 // pred_check
          %p349 = pneg %p88
        $region42: #{tpu_custom_call.1} parent=35 // pred_check_branch
          %351 = sbr.rel (%p349) target = $region44
        $region43: #{tpu_custom_call.1} parent=35 // pred_region
          %s352 = sand.u32 %s26, 1
          %s353 = scalar_lea.sflag [#allocation9], %s352
          %s354 = sand.u32 %s78, 1
          %s355 = smul.addr %s354, 8
          %s356 = scalar_lea.vmem [#allocation8], %s355
          %358 = vsyncadd %s353, 0
          %s359 = smul.addr %s33, 4
          %s360 = sadd.s32 %s34, %s359
          %s361 = smul.addr %s360, 2
          %s362 = scalar_lea.hbm %s1, %s361
          %s363 = sshll.u32 %s362, 4
          %s364 = int_to_ptr.hbm [resolvable:$true] %s363
          %s365 = sshll.u32 %s356, 4
          %s366 = int_to_ptr.vmem [resolvable:$true] %s365
          %371 = dma.hbm_to_vmem [thread:$0]  %s364, 128, %s366, %s353, 32, 32, 2
        $region44: #{tpu_custom_call.1} parent=35 // pred_fallthru
          _
      $region36: #{tpu_custom_call.1} parent=5 // pred_fallthru
        _
      %p372 = scmp.le.s32.totalorder 1, %s26
      %p373 = scmp.lt.s32.totalorder %s26, 3
      %p374 = pnand %p372, %p373
      %p375 = pneg %p374
      // Predicated region
      $region45: #{tpu_custom_call.1} parent=5 // pred_check
        _
      $region46: #{tpu_custom_call.1} parent=5 // pred_check_branch
        %377 = sbr.rel (%p374) target = $region48
      $region47: #{tpu_custom_call.1} parent=5 // pred_region
        %s378 = ssub.s32 %s26, 1
        %s379 = sand.u32 %s53, 1
        %s380 = scalar_lea.sflag [#allocation6], %s379
        %s381 = sand.u32 %s53, 1
        %s382 = smul.addr %s381, 8
        %s383 = scalar_lea.vmem [#allocation5], %s382
        // Predicated region
        $region49: #{tpu_custom_call.1} parent=47 // pred_check
          %p384 = pneg %p66
        $region50: #{tpu_custom_call.1} parent=47 // pred_check_branch
          %386 = sbr.rel (%p384) target = $region52
        $region51: #{tpu_custom_call.1} parent=47 // pred_region
          %388 = dma.done %s380, 128
        $region52: #{tpu_custom_call.1} parent=47 // pred_fallthru
          _
        %s389 = sand.u32 %s31, 1
        %s390 = scalar_lea.sflag [#allocation9], %s389
        %s391 = sand.u32 %s81, 1
        %s392 = smul.addr %s391, 8
        %s393 = scalar_lea.vmem [#allocation8], %s392
        // Predicated region
        $region53: #{tpu_custom_call.1} parent=47 // pred_check
          %p394 = pneg %p94
        $region54: #{tpu_custom_call.1} parent=47 // pred_check_branch
          %396 = sbr.rel (%p394) target = $region56
        $region55: #{tpu_custom_call.1} parent=47 // pred_region
          %398 = dma.done %s390, 128
        $region56: #{tpu_custom_call.1} parent=47 // pred_fallthru
          _
        // Predicated region
        $region57: #{tpu_custom_call.1} parent=47 // pred_check
          %p399 = pneg %p115
        $region58: #{tpu_custom_call.1} parent=47 // pred_check_branch
          %401 = sbr.rel (%p399) target = $region60
        $region59: #{tpu_custom_call.1} parent=47 // pred_region
          %403 = dma.done [#allocation9], 32
        $region60: #{tpu_custom_call.1} parent=47 // pred_fallthru
          _
        %s404 = sand.u32 %s53, 1
        %s405 = scalar_lea.sflag [#allocation6], %s404
        %s406 = sand.u32 %s53, 1
        %s407 = smul.addr %s406, 8
        %s408 = scalar_lea.vmem [#allocation5], %s407
        %p409 = pneg %p66
        %p410 = pneg %p63
        %s411 = sand.u32 %s31, 1
        %s412 = scalar_lea.sflag [#allocation9], %s411
        %s413 = sand.u32 %s81, 1
        %s414 = smul.addr %s413, 8
        %s415 = scalar_lea.vmem [#allocation8], %s414
        %p416 = pneg %p94
        %p417 = pneg %p91
        %p418 = pneg %p115
        %p419 = pneg %p112
        %p420 = pneg %p136
        %p421 = pneg %p133
        %p422 = pneg %p157
        %p423 = pneg %p154
        %p424 = pneg %p178
        %p425 = pneg %p175
        %p426 = pneg %p199
        %p427 = pneg %p196
        %p428 = pneg %p220
        %p429 = pneg %p217
        %p430 = pneg %p241
        %p431 = pneg %p238
        %p432 = pneg %p262
        %p433 = pneg %p259
        %p434 = pneg %p283
        %p435 = pneg %p280
        %p436 = scmp.eq.s32.totalorder %s35, 0
        %p437 = scmp.eq.s32.totalorder %s36, 0
        %p438 = pnand %p436, %p437
        %p439 = pneg %p438
        %p440 = scmp.eq.s32.totalorder %s35, 1
        %p441 = pnand %p440, %p437
        %p442 = pneg %p441
        // Predicated region
        $region61: #{tpu_custom_call.1} parent=47 // pred_check
          _
        $region62: #{tpu_custom_call.1} parent=47 // pred_check_branch
          %444 = sbr.rel (%p438) target = $region64
        $region63: #{tpu_custom_call.1} parent=47 // pred_region
          %445 = vst [vmem:[#allocation2] sm:$0x1] 0.0
          %446 = vst [vmem:[#allocation3] sm:$0x1] 0.0
          %447 = vst [vmem:[#allocation4] sm:$0x1] 0.0
        $region64: #{tpu_custom_call.1} parent=47 // pred_fallthru
          _
        %v448 = vld [vmem:[%s383] sm:$0x3]
        %v449 = vld [vmem:[%s383 + $0x2] sm:$0x3]
        %v450 = vld [vmem:[%s383 + $0x4] sm:$0x3]
        %v451 = vld [vmem:[%s383 + $0x6] sm:$0x3]
        %v452 = vld [vmem:[%s393] sm:$0x3]
        %v453 = vld [vmem:[%s393 + $0x2] sm:$0x3]
        %v454 = vld [vmem:[%s393 + $0x4] sm:$0x3]
        %v455 = vld [vmem:[%s393 + $0x6] sm:$0x3]
        %vm456 = vcmask 1041408
        %v457 = vsel %vm456, %v448, -inf
        %v458 = vsel %vm456, %v449, -inf
        %v459 = vsel %vm456, %v450, -inf
        %v460 = vsel %vm456, %v451, -inf
        %v461 = vmax.f32 %v457, %v458
        %v462 = vmax.f32 %v459, %v460
        %v463 = vmax.f32 %v461, %v462
        %v464 = vsub.f32 %v448, %v463
        %v465 = vsub.f32 %v449, %v463
        %v466 = vsub.f32 %v450, %v463
        %v467 = vsub.f32 %v451, %v463
        %v468 = vmul.f32 %v464, 1.442695
        %v469 = vpow.pop %v468
        %v470 = vmul.f32 %v465, 1.442695
        %v471 = vpow.pop %v470
        %v472 = vmul.f32 %v466, 1.442695
        %v473 = vpow.pop %v472
        %v474 = vmul.f32 %v467, 1.442695
        %v475 = vpow.pop %v474
        %v476 = vsel %vm456, %v469, 0.0
        %v477 = vsel %vm456, %v471, 0.0
        %v478 = vadd.f32 %v476, %v477
        %v479 = vsel %vm456, %v473, 0.0
        %v480 = vadd.f32 %v478, %v479
        %v481 = vsel %vm456, %v475, 0.0
        %v482 = vadd.f32 %v480, %v481
        %v483 = vrcp.pop %v482
        %v484 = vmul.f32 %v482, %v483
        %v485 = vsub.f32 1.0, %v484
        %v486 = vmul.f32 %v483, %v485
        %v487 = vadd.f32 %v483, %v486
        %vm488 = vweird.f32 %v482
        %vm489 = vweird.f32 %v483
        %vm490 = vmor %vm488, %vm489
        %v491 = vsel %vm490, %v483, %v487
        %v492 = vand.u32 2147483647, %v482
        %vm493 = vcmp.eq.f32.partialorder %v492, 8.507059e+37
        %v494 = vand.u32 %v482, 2147483648
        %v495 = vor.u32 1.1754944e-38, %v494
        %v496 = vsel %vm493, %v495, %v491
        %v497 = vmul.f32 1.0, %v496
        %v498 = vmul.f32 %v469, %v452
        %v499 = vmul.f32 %v471, %v453
        %v500 = vmul.f32 %v473, %v454
        %v501 = vmul.f32 %v475, %v455
        %v502 = vsel %vm456, %v498, 0.0
        %v503 = vsel %vm456, %v499, 0.0
        %v504 = vadd.f32 %v502, %v503
        %v505 = vsel %vm456, %v500, 0.0
        %v506 = vadd.f32 %v504, %v505
        %v507 = vsel %vm456, %v501, 0.0
        %v508 = vadd.f32 %v506, %v507
        %v509 = vmul.f32 %v508, %v497
        %v510 = vmul.f32 %v482, %v497
        %v511 = vsel %vm456, %v452, 0.0
        %v512 = vsel %vm456, %v453, 0.0
        %v513 = vadd.f32 %v511, %v512
        %v514 = vsel %vm456, %v454, 0.0
        %v515 = vadd.f32 %v513, %v514
        %v516 = vsel %vm456, %v455, 0.0
        %v517 = vadd.f32 %v515, %v516
        %v518 = vld [vmem:[#allocation2] sm:$0x1]
        %v519 = vsel %vm456, %v509, 0.0
        %v520 = vrot.slane %v519, 4
        %v521 = vadd.f32 %v519, %v520
        %v522 = vrot.slane %v521, 2
        %v523 = vadd.f32 %v521, %v522
        %v524 = vrot.slane %v523, 1
        %v525 = vadd.f32 %v523, %v524
        %v526 = vadd.f32 %v518, %v525
        %527 = vst [vmem:[#allocation2] sm:$0x1] %v526
        %v528 = vld [vmem:[#allocation3] sm:$0x1]
        %v529 = vsel %vm456, %v510, 0.0
        %v530 = vrot.slane %v529, 4
        %v531 = vadd.f32 %v529, %v530
        %v532 = vrot.slane %v531, 2
        %v533 = vadd.f32 %v531, %v532
        %v534 = vrot.slane %v533, 1
        %v535 = vadd.f32 %v533, %v534
        %v536 = vadd.f32 %v528, %v535
        %537 = vst [vmem:[#allocation3] sm:$0x1] %v536
        %v538 = vld [vmem:[#allocation4] sm:$0x1]
        %v539 = vsel %vm456, %v517, 0.0
        %v540 = vrot.slane %v539, 4
        %v541 = vadd.f32 %v539, %v540
        %v542 = vrot.slane %v541, 2
        %v543 = vadd.f32 %v541, %v542
        %v544 = vrot.slane %v543, 1
        %v545 = vadd.f32 %v543, %v544
        %v546 = vadd.f32 %v538, %v545
        %547 = vst [vmem:[#allocation4] sm:$0x1] %v546
        // Predicated region
        $region65: #{tpu_custom_call.1} parent=47 // pred_check
          _
        $region66: #{tpu_custom_call.1} parent=47 // pred_check_branch
          %549 = sbr.rel (%p441) target = $region68
        $region67: #{tpu_custom_call.1} parent=47 // pred_region
          %v550 = vld [vmem:[#allocation2] sm:$0x1]
          %vm551 = vcmask 1040384
          %v552 = vsel %vm551, %v550, 0.0
          %553 = vadd.xlane.f32.xlu0 %v552
          %v554 = vpop.xlane.xlu0 %553
          %v555 = vrot.slane %v554, 4
          %v556 = vadd.f32 %v554, %v555
          %v557 = vrot.slane %v556, 2
          %v558 = vadd.f32 %v556, %v557
          %v559 = vrot.slane %v558, 1
          %v560 = vadd.f32 %v558, %v559
          %s561 = vtos %v560
          %v562 = vstv %s561
          %v563 = vld [vmem:[#allocation3] sm:$0x1]
          %v564 = vsel %vm551, %v563, 0.0
          %565 = vadd.xlane.f32.xlu0 %v564
          %v566 = vpop.xlane.xlu0 %565
          %v567 = vrot.slane %v566, 4
          %v568 = vadd.f32 %v566, %v567
          %v569 = vrot.slane %v568, 2
          %v570 = vadd.f32 %v568, %v569
          %v571 = vrot.slane %v570, 1
          %v572 = vadd.f32 %v570, %v571
          %s573 = vtos %v572
          %v574 = vstv %s573
          %v575 = vld [vmem:[#allocation4] sm:$0x1]
          %v576 = vsel %vm551, %v575, 0.0
          %577 = vadd.xlane.f32.xlu0 %v576
          %v578 = vpop.xlane.xlu0 %577
          %v579 = vrot.slane %v578, 4
          %v580 = vadd.f32 %v578, %v579
          %v581 = vrot.slane %v580, 2
          %v582 = vadd.f32 %v580, %v581
          %v583 = vrot.slane %v582, 1
          %v584 = vadd.f32 %v582, %v583
          %s585 = vtos %v584
          %v586 = vstv %s585
          %v587 = vmul.f32 %v562, 2.0
          %v588 = vadd.f32 %v587, 1e-08
          %v589 = vadd.f32 %v574, %v586
          %v590 = vadd.f32 %v589, 1e-08
          %v591 = vrcp.pop %v590
          %v592 = vmul.f32 %v590, %v591
          %v593 = vsub.f32 1.0, %v592
          %v594 = vmul.f32 %v591, %v593
          %v595 = vadd.f32 %v591, %v594
          %vm596 = vweird.f32 %v590
          %vm597 = vweird.f32 %v591
          %vm598 = vmor %vm596, %vm597
          %v599 = vsel %vm598, %v591, %v595
          %v600 = vand.u32 2147483647, %v590
          %vm601 = vcmp.eq.f32.partialorder %v600, 8.507059e+37
          %v602 = vand.u32 %v590, 2147483648
          %v603 = vor.u32 1.1754944e-38, %v602
          %v604 = vsel %vm601, %v603, %v599
          %v605 = vmul.f32 %v588, %v604
          %v606 = vsub.f32 1.0, %v605
          %v607 = vld [vmem:[#allocation10] sm:$0x3]
          %vm608 = vcmask 17408
          %v609 = vsel %vm608, %v607, -inf
          %610 = vmax.xlane.f32.xlu0 %v609
          %v611 = vpop.xlane.xlu0 %610
          %v612 = vsub.f32 %v607, %v611
          %v613 = vmul.f32 %v612, 1.442695
          %v614 = vpow.pop %v613
          %v615 = vsel %vm608, %v614, 0.0
          %616 = vadd.xlane.f32.xlu0 %v615
          %v617 = vpop.xlane.xlu0 %616
          %v618 = vlog2.pop %v617
          %v619 = vmul.f32 %v618, 0.6931472
          %v620 = vadd.f32 %v619, %v611
          %v621 = vld [vmem:[%s3] sm:$0x3]
          %v622 = vsub.f32 %v607, %v620
          %v623 = vmul.f32 %v621, %v622
          %v624 = vsel %vm608, %v623, 0.0
          %625 = vadd.xlane.f32.xlu0 %v624
          %v626 = vpop.xlane.xlu0 %625
          %v627 = vrot.slane %v626, 4
          %v628 = vadd.f32 %v626, %v627
          %v629 = vrot.slane %v628, 2
          %v630 = vadd.f32 %v628, %v629
          %v631 = vrot.slane %v630, 1
          %v632 = vadd.f32 %v630, %v631
          %s633 = vtos %v632
          %v634 = vstv %s633
          %v635 = vsub.f32 0.0, %v634
          %v636 = vrcp.pop 2.0
          %v637 = vmul.f32 2.0, %v636
          %v638 = vsub.f32 1.0, %v637
          %v639 = vmul.f32 %v636, %v638
          %v640 = vadd.f32 %v636, %v639
          %vm641 = vweird.f32 %v636
          %v642 = vsel %vm641, %v636, %v640
          %v643 = vmul.f32 %v635, %v642
          %v644 = vld [vmem:[%s4] sm:$0x1]
          %v645 = vld [vmem:[%s5] sm:$0x1]
          %v646 = vsub.f32 %v644, %v645
          %v647 = vmul.f32 %v646, %v646
          %vm648 = vcmask 8192
          %v649 = vsel %vm648, %v647, 0.0
          %650 = vadd.xlane.f32.xlu0 %v649
          %v651 = vpop.xlane.xlu0 %650
          %v652 = vrot.slane %v651, 4
          %v653 = vadd.f32 %v651, %v652
          %v654 = vrot.slane %v653, 2
          %v655 = vadd.f32 %v653, %v654
          %v656 = vrot.slane %v655, 1
          %v657 = vadd.f32 %v655, %v656
          %s658 = vtos %v657
          %v659 = vstv %s658
          %v660 = vmul.f32 %v659, %v642
          %v661 = vld [vmem:[%s6] sm:$0x1]
          %v662 = vsub.f32 0.0, %v661
          %v663 = vmul.f32 %v662, 1.442695
          %v664 = vpow.pop %v663
          %v665 = vmul.f32 %v664, %v606
          %v666 = vadd.f32 %v665, %v661
          %v667 = vmul.f32 %v664, %v643
          %669 = vrot.lane.b32.xlu0 %v667, 127
          %v670 = vpop.permute.xlu0 %669
          %v672 = vadd.f32 %v666, %v670
          %674 = vrot.lane.b32.xlu0 %v661, 127
          %v675 = vpop.permute.xlu0 %674
          %v677 = vadd.f32 %v672, %v675
          %v678 = vmul.f32 %v664, %v660
          %680 = vrot.lane.b32.xlu0 %v678, 126
          %v681 = vpop.permute.xlu0 %680
          %v683 = vadd.f32 %v677, %v681
          %684 = vrot.lane.b32.xlu0 %v661, 126
          %v685 = vpop.permute.xlu0 %684
          %v687 = vadd.f32 %v683, %v685
          %vm688 = vcmask 0
          %689 = vst.msk [vmem:[#allocation11] sm:$0x1] %vm688, %v687
          %690 = vst.msk [vmem:[#allocation12] sm:$0x1] %vm688, %v606
          %691 = vst.msk [vmem:[#allocation14] sm:$0x1] %vm688, %v643
          %692 = vst.msk [vmem:[#allocation15] sm:$0x1] %vm688, %v660
        $region68: #{tpu_custom_call.1} parent=47 // pred_fallthru
          _
        // Predicated region
        $region69: #{tpu_custom_call.1} parent=47 // pred_check
          %p693 = pneg %p217
        $region70: #{tpu_custom_call.1} parent=47 // pred_check_branch
          %695 = sbr.rel (%p693) target = $region72
        $region71: #{tpu_custom_call.1} parent=47 // pred_region
          %697 = vsyncadd [#allocation7], 0
          %s699 = sshll.u32 [#allocation11], 4
          %s700 = int_to_ptr.vmem [resolvable:$true] %s699
          %s701 = sshll.u32 %s7, 4
          %s702 = int_to_ptr.hbm [resolvable:$true] %s701
          %704 = dma.vmem_to_hbm [thread:$0]  %s700, 16, %s702, [#allocation7]
        $region72: #{tpu_custom_call.1} parent=47 // pred_fallthru
          _
        // Predicated region
        $region73: #{tpu_custom_call.1} parent=47 // pred_check
          %p705 = pneg %p238
        $region74: #{tpu_custom_call.1} parent=47 // pred_check_branch
          %707 = sbr.rel (%p705) target = $region76
        $region75: #{tpu_custom_call.1} parent=47 // pred_region
          %709 = vsyncadd [#allocation13], 0
          %s711 = sshll.u32 [#allocation12], 4
          %s712 = int_to_ptr.vmem [resolvable:$true] %s711
          %s713 = sshll.u32 %s8, 4
          %s714 = int_to_ptr.hbm [resolvable:$true] %s713
          %716 = dma.vmem_to_hbm [thread:$0]  %s712, 16, %s714, [#allocation13]
        $region76: #{tpu_custom_call.1} parent=47 // pred_fallthru
          _
        // Predicated region
        $region77: #{tpu_custom_call.1} parent=47 // pred_check
          %p717 = pneg %p259
        $region78: #{tpu_custom_call.1} parent=47 // pred_check_branch
          %719 = sbr.rel (%p717) target = $region80
        $region79: #{tpu_custom_call.1} parent=47 // pred_region
          %721 = vsyncadd [#allocation13], 0
          %s723 = sshll.u32 [#allocation14], 4
          %s724 = int_to_ptr.vmem [resolvable:$true] %s723
          %s725 = sshll.u32 %s9, 4
          %s726 = int_to_ptr.hbm [resolvable:$true] %s725
          %728 = dma.vmem_to_hbm [thread:$0]  %s724, 16, %s726, [#allocation13]
        $region80: #{tpu_custom_call.1} parent=47 // pred_fallthru
          _
        // Predicated region
        $region81: #{tpu_custom_call.1} parent=47 // pred_check
          %p729 = pneg %p280
        $region82: #{tpu_custom_call.1} parent=47 // pred_check_branch
          %731 = sbr.rel (%p729) target = $region84
        $region83: #{tpu_custom_call.1} parent=47 // pred_region
          %733 = vsyncadd [#allocation16], 0
          %s735 = sshll.u32 [#allocation15], 4
          %s736 = int_to_ptr.vmem [resolvable:$true] %s735
          %s737 = sshll.u32 %s10, 4
          %s738 = int_to_ptr.hbm [resolvable:$true] %s737
          %740 = dma.vmem_to_hbm [thread:$0]  %s736, 16, %s738, [#allocation16]
        $region84: #{tpu_custom_call.1} parent=47 // pred_fallthru
          _
        // Predicated region
        $region85: #{tpu_custom_call.1} parent=47 // pred_check
          %p741 = pneg %p217
        $region86: #{tpu_custom_call.1} parent=47 // pred_check_branch
          %743 = sbr.rel (%p741) target = $region88
        $region87: #{tpu_custom_call.1} parent=47 // pred_region
          %745 = dma.done [#allocation7], 16
        $region88: #{tpu_custom_call.1} parent=47 // pred_fallthru
          _
        // Predicated region
        $region89: #{tpu_custom_call.1} parent=47 // pred_check
          %p746 = pneg %p238
        $region90: #{tpu_custom_call.1} parent=47 // pred_check_branch
          %748 = sbr.rel (%p746) target = $region92
        $region91: #{tpu_custom_call.1} parent=47 // pred_region
          %750 = dma.done [#allocation13], 16
        $region92: #{tpu_custom_call.1} parent=47 // pred_fallthru
          _
        // Predicated region
        $region93: #{tpu_custom_call.1} parent=47 // pred_check
          %p751 = pneg %p259
        $region94: #{tpu_custom_call.1} parent=47 // pred_check_branch
          %753 = sbr.rel (%p751) target = $region96
        $region95: #{tpu_custom_call.1} parent=47 // pred_region
          %755 = dma.done [#allocation13], 16
        $region96: #{tpu_custom_call.1} parent=47 // pred_fallthru
          _
        // Predicated region
        $region97: #{tpu_custom_call.1} parent=47 // pred_check
          %p756 = pneg %p280
        $region98: #{tpu_custom_call.1} parent=47 // pred_check_branch
          %758 = sbr.rel (%p756) target = $region100
        $region99: #{tpu_custom_call.1} parent=47 // pred_region
          %760 = dma.done [#allocation16], 16
        $region100: #{tpu_custom_call.1} parent=47 // pred_fallthru
          _
      $region48: #{tpu_custom_call.1} parent=5 // pred_fallthru
        _
      %p761 = scmp.le.s32.totalorder 2, %s26
      // Predicated region
      $region101: #{tpu_custom_call.1} parent=5 // pred_check
        %p762 = pneg %p761
      $region102: #{tpu_custom_call.1} parent=5 // pred_check_branch
        %764 = sbr.rel (%p762) target = $region104
      $region103: #{tpu_custom_call.1} parent=5 // pred_region
        %s765 = ssub.s32 %s26, 2
      $region104: #{tpu_custom_call.1} parent=5 // pred_fallthru
        _
    $region6: #{tpu_custom_call.1} parent=1 // loop_footer
      %s30 = sadd.s32 1, %s26
    $region7: #{tpu_custom_call.1} parent=1 // loop_footer_branch
      %25 = sbr.rel target = $region3
    $region8: #{tpu_custom_call.1} parent=1 // loop_exit
      _
    %766 = vsyncpa [#allocation6], 1
    %s767 = scalar_lea.sflag [#allocation6], 1
    %768 = vsyncpa %s767, 1
    %769 = vsyncpa [#allocation9], 1
    %s770 = scalar_lea.sflag [#allocation9], 1
    %771 = vsyncpa %s770, 1
    %772 = vsyncpa [#allocation7], 1
    %s773 = scalar_lea.sflag [#allocation7], 1
    %774 = vsyncpa %s773, 1
    %775 = vsyncpa [#allocation13], 1
    %776 = vsyncpa [#allocation16], 1

</llo_original>
